<compile_context>
chip_gen: v7x
topology: tpu7x:2x2x1
jax: 0.10.0
libtpu: 0.0.40
codegen_flags: <defaults>
</compile_context>

<pallas_src>
import math

import jax
import jax.numpy as jnp
from jax.experimental import pallas as pl
from jax.experimental.pallas import tpu as pltpu


def _cdiv(a, b):
    return -(-a // b)


def _round_up(a, m):
    return _cdiv(a, m) * m


def _prefer_divisor(total, tile, step):
    """Largest multiple of `step` <= tile (but > tile//2) that divides `total`."""
    if total % tile == 0:
        return tile
    t = (tile // step) * step
    while t >= step and t > tile // 2:
        if total % t == 0:
            return t
        t -= step
    return tile


def _choose_tiles(B, C, HW, bytes_per_elem, c_gran,
                  resident_budget=24 << 20, min_grid_steps=8):
    """Pick a (t_c, t_hw) tile for the elementwise (C, HW) add.

    Constraints / goals:
      * t_hw multiple of 128 (or == HW); t_c multiple of c_gran (or == C).
      * 2 pipeline buffers x 3 streams (x, pe, out) of (t_c, t_hw) blocks stay
        within `resident_budget` bytes (fits v7x's 64 MiB physical VMEM).
      * Prefer wide lane tiles (>= 1024 where possible) for HBM-roofline adds.
      * Keep the last tile unmasked by preferring tiles that divide evenly.
      * Guarantee a handful of grid steps for megacore + pipeline overlap.
    """
    max_block_elems = max(resident_budget // (2 * bytes_per_elem), c_gran * 128)
    c_full = _round_up(C, c_gran)

    if c_full * max(HW, 128) <= max_block_elems:
        t_c, t_hw = C, HW
    else:
        # Lane tile first: as wide as practical, multiple of 128.
        t_hw = max((min(HW, 2048) // 128) * 128, 128)
        while t_hw > 128 and c_gran * t_hw > max_block_elems:
            t_hw -= 128
        if t_hw > HW:
            t_hw = HW
        # Channel tile with the remaining budget.
        t_c = max_block_elems // max(_round_up(t_hw, 128), 128)
        if t_c >= C:
            t_c = C
        else:
            t_c = max((t_c // c_gran) * c_gran, min(c_gran, C))

    # Enough grid steps so both v7x TensorCores get work and the pipeline can
    # prefetch step i+1 while computing step i.
    def n_steps(tc, th):
        return _cdiv(C, tc) * _cdiv(HW, th) * B

    while n_steps(t_c, t_hw) < min_grid_steps and t_hw > 512:
        smaller = max(512, ((t_hw // 2) // 128) * 128)
        if smaller >= t_hw:
            break
        t_hw = smaller
    if _cdiv(HW, t_hw) == 1 and HW >= 256 and n_steps(t_c, t_hw) < min_grid_steps:
        t_hw = max(128, _round_up(_cdiv(HW, 2), 128))  # at least 2 HW tiles

    # Prefer evenly dividing tiles (keeps the last tile's stores unmasked).
    if 0 < t_hw < HW:
        t_hw = _prefer_divisor(HW, t_hw, 128)
    if 0 < t_c < C:
        t_c = _prefer_divisor(C, t_c, c_gran)
    return t_c, t_hw


def _add_pe_kernel(x_ref, pe_ref, o_ref):
    # x_ref / pe_ref / o_ref: (t_c, t_hw) VMEM tiles.  Pure elementwise add;
    # promotion (e.g. bf16 x + f32 table) happens in-register, cast on store.
    o_ref[...] = (x_ref[...] + pe_ref[...]).astype(o_ref.dtype)


def axial_positional_embedding(x, pe_params, *, inplace=False):
    """x: (B, C, *spatial); pe_params[d]: (1, C, *[S_d if j==d else 1])."""
    B, C = x.shape[0], x.shape[1]
    spatial = tuple(x.shape[2:])
    HW = math.prod(spatial)

    # PyTorch-style dtype promotion for the result.
    out_dtype = jnp.result_type(x.dtype, *[p.dtype for p in pe_params])
    out_itemsize = jnp.dtype(out_dtype).itemsize

    # Fuse the per-axis learnable tables into one full (C, HW) table in the
    # output dtype (tiny prep, amortized across the batch); the kernel then
    # reads a single shared positional stream once per (c, hw) tile.
    pe = pe_params[0].astype(out_dtype)
    for p in pe_params[1:]:
        pe = pe + p.astype(out_dtype)
    pe = jnp.broadcast_to(pe, (1, C) + spatial).reshape(C, HW)

    x_f = x.reshape(B, C, HW)

    x_item = x_f.dtype.itemsize
    pe_item = pe.dtype.itemsize
    bytes_per_elem = x_item + pe_item + out_itemsize
    # Sublane granularity: 8 for 4-byte, 16 for 2-byte, 32 for 1-byte dtypes.
    c_gran = max(8, max(32 // it for it in (x_item, pe_item, out_itemsize)))

    t_c, t_hw = _choose_tiles(B, C, HW, bytes_per_elem, c_gran)
    n_c, n_hw = _cdiv(C, t_c), _cdiv(HW, t_hw)

    # Explicit scoped-VMEM limit: 2 buffers x 3 streams of padded blocks plus
    # headroom, capped below v7x's 64 MiB physical VMEM.
    resident = 2 * _round_up(t_c, c_gran) * _round_up(t_hw, 128) * bytes_per_elem
    vmem_limit = int(min(max(2 * resident + (2 << 20), 24 << 20), 48 << 20))

    # Optional in-place write over x (only pays off under jit + donation).
    aliases = {0: 0} if (inplace and x_f.dtype == jnp.dtype(out_dtype)) else {}

    out = pl.pallas_call(
        _add_pe_kernel,
        out_shape=jax.ShapeDtypeStruct((B, C, HW), out_dtype),
        grid_spec=pltpu.PrefetchScalarGridSpec(
            num_scalar_prefetch=0,
            # Batch innermost: the pe block index depends only on (c, h), so
            # its re-DMA is skipped across consecutive batch steps.
            grid=(n_c, n_hw, B),
            in_specs=[
                pl.BlockSpec((None, t_c, t_hw), lambda c, h, b: (b, c, h)),  # x
                pl.BlockSpec((t_c, t_hw), lambda c, h, b: (c, h)),           # pe
            ],
            out_specs=pl.BlockSpec((None, t_c, t_hw), lambda c, h, b: (b, c, h)),
        ),
        compiler_params=pltpu.CompilerParams(
            dimension_semantics=("parallel", "parallel", "parallel"),
            vmem_limit_bytes=vmem_limit,
        ),
        cost_estimate=pl.CostEstimate(
            flops=B * C * HW,
            transcendentals=0,
            bytes_accessed=B * C * HW * (x_item + out_itemsize) + C * HW * pe_item,
        ),
        input_output_aliases=aliases,
    )(x_f, pe)
    return out.reshape((B, C) + spatial)


def init_axial_pos_embed(key, channels, spatial_size, dtype=jnp.float32):
    """Matches the PyTorch init: one (1, C, ..., S_d, ..., 1) normal(std=1) param per axis."""
    keys = jax.random.split(key, len(spatial_size))
    ndim = len(spatial_size)
    params = []
    for dim, size in enumerate(spatial_size):
        shape = (1, channels) + tuple(size if j == dim else 1 for j in range(ndim))
        params.append(jax.random.normal(keys[dim], shape, dtype=dtype))
    return params


def _reference(x, pe_params):
    out = x
    for p in pe_params:
        out = out + p
    return out


if __name__ == "__main__":
    B, C, H, W = 2, 4, 16, 16
    key = jax.random.PRNGKey(0)
    kx, kp = jax.random.split(key)
    x = jax.random.normal(kx, (B, C, H, W), dtype=jnp.float32)
    pe_params = init_axial_pos_embed(kp, C, (H, W))

    out = jax.block_until_ready(axial_positional_embedding(x, pe_params))
    ref = _reference(x, pe_params)

    assert out.shape == (B, C, H, W)
    assert out.dtype == ref.dtype
    assert jnp.allclose(out, ref, atol=1e-5, rtol=1e-5)
    print("KERNEL_OK")
</pallas_src>

<mosaic_0001>
module attributes {stable_mosaic.version = 11 : i64} {
  func.func @_add_pe_kernel(%arg0: i32, %arg1: i32, %arg2: i32, %arg3: memref<1x4x128xf32, #tpu.memory_space<vmem>>, %arg4: memref<4x128xf32, #tpu.memory_space<vmem>>, %arg5: memref<1x4x128xf32, #tpu.memory_space<vmem>>) attributes {dimension_semantics = [#tpu.dimension_semantics<parallel>, #tpu.dimension_semantics<parallel>, #tpu.dimension_semantics<parallel>], iteration_bounds = array<i64: 1, 2, 2>, scalar_prefetch = 0 : i64, scratch_operands = 0 : i64, tpu.core_type = #tpu.core_type<tc>, window_params = [{transform_indices = @transform_0, window_bounds = array<i64: 1, 4, 128>}, {transform_indices = @transform_1, window_bounds = array<i64: 4, 128>}, {transform_indices = @transform_2, window_bounds = array<i64: 1, 4, 128>}]} {
    %c0 = arith.constant 0 : index
    %c0_0 = arith.constant 0 : index
    %c0_1 = arith.constant 0 : index
    %0 = vector.load %arg3[%c0, %c0_0, %c0_1] : memref<1x4x128xf32, #tpu.memory_space<vmem>>, vector<1x4x128xf32>
    %1 = vector.shape_cast %0 : vector<1x4x128xf32> to vector<4x128xf32>
    %c0_2 = arith.constant 0 : index
    %c0_3 = arith.constant 0 : index
    %2 = vector.load %arg4[%c0_2, %c0_3] : memref<4x128xf32, #tpu.memory_space<vmem>>, vector<4x128xf32>
    %3 = arith.addf %1, %2 : vector<4x128xf32>
    %c0_4 = arith.constant 0 : index
    %c0_5 = arith.constant 0 : index
    %c0_6 = arith.constant 0 : index
    %4 = vector.load %arg5[%c0_4, %c0_5, %c0_6] : memref<1x4x128xf32, #tpu.memory_space<vmem>>, vector<1x4x128xf32>
    %5 = vector.shape_cast %4 : vector<1x4x128xf32> to vector<4x128xf32>
    %6 = vector.shape_cast %3 : vector<4x128xf32> to vector<1x4x128xf32>
    tpu.vector_store %arg5[%c0_4, %c0_5, %c0_6], %6 {strides = array<i32>} : memref<1x4x128xf32, #tpu.memory_space<vmem>>, vector<1x4x128xf32>,
    return
  }
  func.func @transform_0(%arg0: i32, %arg1: i32, %arg2: i32) -> (i32, i32, i32) {
    %c0_i32 = arith.constant 0 : i32
    return %arg2, %arg0, %arg1 : i32, i32, i32
  }
  func.func @transform_1(%arg0: i32, %arg1: i32, %arg2: i32) -> (i32, i32) {
    %c0_i32 = arith.constant 0 : i32
    return %arg0, %arg1 : i32, i32
  }
  func.func @transform_2(%arg0: i32, %arg1: i32, %arg2: i32) -> (i32, i32, i32) {
    %c0_i32 = arith.constant 0 : i32
    return %arg2, %arg0, %arg1 : i32, i32, i32
  }
}

</mosaic_0001>

<llo_original>
// kernel: tpu_custom_call.1
$region0: #{tpu_custom_call.1}
  #allocation0 [shape = 'u32[]', space=smem, size = 0x4, offset = 0x4, fixed_abs, tag = 'smem constant byte address 0x4 - core index']
  #allocation1 [shape = 'u32[144,128]{1,0:T(1,128)}', space=vmem, size = 0x12000, scoped, tag = 'internal scratch']
  %s0 = inlined_call_operand.hbm [shape: f32[2,4,256], index: 0, kind: input, shape index: {}]
  %s1 = inlined_call_operand.hbm [shape: f32[4,256], index: 1, kind: input, shape index: {}]
  %s2 = inlined_call_operand.hbm [shape: f32[2,4,256], index: 2, kind: output, shape index: {}]
  %s3 = sld [smem:[#allocation0]]
  $region49: #{tpu_custom_call.1} parent=0
    _
  %s5 = ssub.s32 1, %s3
  %s6 = scalar_select 0, %s5, %s3
  $region1: #{tpu_custom_call.1} parent=0
    #allocation2 [shape = 'u8[4096]{0}', space=vmem, size = 0x1000, scoped, tag = 'input window, operand 0']
    #allocation3 [shape = 's32[2]{0}', space=sflag, size = 0x8, scoped, tag = 'scoped memory for tpu_custom_call.1']
    #allocation4 [shape = 's32[2]{0}', space=sflag, size = 0x8, scoped, tag = 'scoped memory for tpu_custom_call.1']
    #allocation5 [shape = 'u8[4096]{0}', space=vmem, size = 0x1000, scoped, tag = 'input window, operand 1']
    #allocation6 [shape = 's32[2]{0}', space=sflag, size = 0x8, scoped, tag = 'scoped memory for tpu_custom_call.1']
    #allocation7 [shape = 'u8[4096]{0}', space=vmem, size = 0x1000, scoped, tag = 'output window, operand 0']
    %7 = vsyncpa [#allocation3], 0
    %s8 = scalar_lea.sflag [#allocation3], 1
    %9 = vsyncpa %s8, 0
    %10 = vsyncpa [#allocation6], 0
    %s11 = scalar_lea.sflag [#allocation6], 1
    %12 = vsyncpa %s11, 0
    %13 = vsyncpa [#allocation4], 0
    %s14 = scalar_lea.sflag [#allocation4], 1
    %15 = vsyncpa %s14, 0
    loop: start=0, step=1, limit=6
    $region2: #{tpu_custom_call.1} parent=1 // loop_pre_header
      _
    $region3: #{tpu_custom_call.1} parent=1 // loop_header
      %s17 = sphi 0, %s21
      %p18 = scmp.ge.s32.totalorder %s17, 6
      %s24 = sphi 0, %s43
      %s25 = sphi 0, %s39
      %s26 = sphi 0, %s35
      %s27 = sphi 0, %s24
      %s28 = sphi 0, %s25
      %s29 = sphi 0, %s26
      %s30 = sphi 0, %s27
      %s31 = sphi 0, %s28
      %s32 = sphi 0, %s29
      %s50 = sphi 0, %s52
      %s53 = sphi 0, %s50
      %s54 = sphi 0, %s53
      %s70 = sphi 0, %s54
      %s78 = sphi 0, %s80
      %s81 = sphi 0, %s78
      %s82 = sphi 0, %s81
      %s98 = sphi 0, %s82
      %s108 = sphi 0, %s110
      %s111 = sphi 0, %s108
      %s112 = sphi 0, %s111
      %s128 = sphi 0, %s112
    $region4: #{tpu_custom_call.1} parent=1 // loop_header_branch
      %20 = sbr.rel (%p18) target = $region8
    $region5: #{tpu_custom_call.1} parent=1 // loop_body
      %s22 = ssub.s32 %s17, 1
      %s23 = ssub.s32 %s17, 2
      %s33 = sadd.s32 1, %s26
      %p34 = scmp.ge.s32.totalorder %s33, 2
      %s35 = scalar_select %p34, 0, %s33
      %s36 = sadd.s32 1, %s25
      %s37 = scalar_select %p34, %s36, %s25
      %p38 = scmp.ge.s32.totalorder %s37, 2
      %s39 = scalar_select %p38, 0, %s37
      %s40 = sadd.s32 1, %s24
      %s41 = scalar_select %p38, %s40, %s24
      %p42 = scmp.ge.s32.totalorder %s41, 1
      %s43 = scalar_select %p42, 0, %s41
      %s44 = ssub.s32 %s26, %s35
      %s45 = ssub.s32 %s24, %s43
      %s46 = sor.u32 %s44, %s45
      %s47 = ssub.s32 %s25, %s39
      %s48 = sor.u32 %s46, %s47
      %p49 = scmp.eq.s32.totalorder %s48, 0
      %s51 = sadd.s32 %s50, 1
      %s52 = scalar_select %p49, %s50, %s51
      %p55 = pneg %p49
      %p56 = scmp.eq.s32.totalorder %s17, 3
      %p57 = por %p55, %p56
      %p58 = scmp.ne.s32.totalorder %s50, %s53
      %p59 = scmp.eq.s32.totalorder %s17, 0
      %p60 = por %p58, %p59
      %p61 = scmp.ne.s32.totalorder %s50, %s53
      %p62 = scmp.eq.s32.totalorder %s22, 3
      %p63 = por %p61, %p62
      %p64 = scmp.ne.s32.totalorder %s53, %s54
      %p65 = scmp.eq.s32.totalorder %s22, 0
      %p66 = por %p64, %p65
      %p67 = scmp.ne.s32.totalorder %s53, %s54
      %p68 = scmp.eq.s32.totalorder %s23, 3
      %p69 = por %p67, %p68
      %p71 = scmp.ne.s32.totalorder %s54, %s70
      %p72 = scmp.eq.s32.totalorder %s23, 0
      %p73 = por %p71, %p72
      %s74 = ssub.s32 %s24, %s43
      %s75 = ssub.s32 %s25, %s39
      %s76 = sor.u32 %s74, %s75
      %p77 = scmp.eq.s32.totalorder %s76, 0
      %s79 = sadd.s32 %s78, 1
      %s80 = scalar_select %p77, %s78, %s79
      %p83 = pneg %p77
      %p84 = scmp.eq.s32.totalorder %s17, 3
      %p85 = por %p83, %p84
      %p86 = scmp.ne.s32.totalorder %s78, %s81
      %p87 = scmp.eq.s32.totalorder %s17, 0
      %p88 = por %p86, %p87
      %p89 = scmp.ne.s32.totalorder %s78, %s81
      %p90 = scmp.eq.s32.totalorder %s22, 3
      %p91 = por %p89, %p90
      %p92 = scmp.ne.s32.totalorder %s81, %s82
      %p93 = scmp.eq.s32.totalorder %s22, 0
      %p94 = por %p92, %p93
      %p95 = scmp.ne.s32.totalorder %s81, %s82
      %p96 = scmp.eq.s32.totalorder %s23, 3
      %p97 = por %p95, %p96
      %p99 = scmp.ne.s32.totalorder %s82, %s98
      %p100 = scmp.eq.s32.totalorder %s23, 0
      %p101 = por %p99, %p100
      %s102 = ssub.s32 %s26, %s35
      %s103 = ssub.s32 %s24, %s43
      %s104 = sor.u32 %s102, %s103
      %s105 = ssub.s32 %s25, %s39
      %s106 = sor.u32 %s104, %s105
      %p107 = scmp.eq.s32.totalorder %s106, 0
      %s109 = sadd.s32 %s108, 1
      %s110 = scalar_select %p107, %s108, %s109
      %p113 = pneg %p107
      %p114 = scmp.eq.s32.totalorder %s17, 3
      %p115 = por %p113, %p114
      %p116 = scmp.ne.s32.totalorder %s108, %s111
      %p117 = scmp.eq.s32.totalorder %s17, 0
      %p118 = por %p116, %p117
      %p119 = scmp.ne.s32.totalorder %s108, %s111
      %p120 = scmp.eq.s32.totalorder %s22, 3
      %p121 = por %p119, %p120
      %p122 = scmp.ne.s32.totalorder %s111, %s112
      %p123 = scmp.eq.s32.totalorder %s22, 0
      %p124 = por %p122, %p123
      %p125 = scmp.ne.s32.totalorder %s111, %s112
      %p126 = scmp.eq.s32.totalorder %s23, 3
      %p127 = por %p125, %p126
      %p129 = scmp.ne.s32.totalorder %s112, %s128
      %p130 = scmp.eq.s32.totalorder %s23, 0
      %p131 = por %p129, %p130
      %p132 = scmp.le.s32.totalorder 1, %s17
      %p133 = scmp.lt.s32.totalorder %s17, 5
      %p134 = pnand %p132, %p133
      %p135 = pneg %p134
      // Predicated region
      $region9: #{tpu_custom_call.1} parent=5 // pred_check
        _
      $region10: #{tpu_custom_call.1} parent=5 // pred_check_branch
        %137 = sbr.rel (%p134) target = $region12
      $region11: #{tpu_custom_call.1} parent=5 // pred_region
        %s138 = ssub.s32 %s17, 1
      $region12: #{tpu_custom_call.1} parent=5 // pred_fallthru
        _
      %p139 = scmp.lt.s32.totalorder %s17, 4
      // Predicated region
      $region13: #{tpu_custom_call.1} parent=5 // pred_check
        %p140 = pneg %p139
      $region14: #{tpu_custom_call.1} parent=5 // pred_check_branch
        %142 = sbr.rel (%p140) target = $region16
      $region15: #{tpu_custom_call.1} parent=5 // pred_region
        // Predicated region
        $region17: #{tpu_custom_call.1} parent=15 // pred_check
          %p143 = pneg %p60
        $region18: #{tpu_custom_call.1} parent=15 // pred_check_branch
          %145 = sbr.rel (%p143) target = $region20
        $region19: #{tpu_custom_call.1} parent=15 // pred_region
          %s146 = sand.u32 %s50, 1
          %s147 = scalar_lea.sflag [#allocation3], %s146
          %s148 = sand.u32 %s50, 1
          %s149 = smul.addr %s148, 4
          %s150 = scalar_lea.vmem [#allocation2], %s149
          %s152 = ssub.s32 64, 64
          %153 = vsyncadd %s147, %s152
          %s154 = smul.addr %s24, 2
          %s155 = sadd.s32 %s25, %s154
          %s156 = smul.addr %s26, 2
          %s157 = sadd.s32 %s155, %s156
          %s158 = smul.addr %s157, 64
          %s159 = scalar_lea.hbm %s0, %s158
          %s161 = sshll.u32 %s150, 4
          %s162 = int_to_ptr.vmem [resolvable:$true] %s161
          %164 = dma.hbm_to_vmem [thread:$0]  %s159, 64, %s162, %s147
        $region20: #{tpu_custom_call.1} parent=15 // pred_fallthru
          _
        // Predicated region
        $region21: #{tpu_custom_call.1} parent=15 // pred_check
          %p165 = pneg %p88
        $region22: #{tpu_custom_call.1} parent=15 // pred_check_branch
          %167 = sbr.rel (%p165) target = $region24
        $region23: #{tpu_custom_call.1} parent=15 // pred_region
          %s168 = sand.u32 %s78, 1
          %s169 = scalar_lea.sflag [#allocation6], %s168
          %s170 = sand.u32 %s78, 1
          %s171 = smul.addr %s170, 4
          %s172 = scalar_lea.vmem [#allocation5], %s171
          %s174 = ssub.s32 64, 64
          %175 = vsyncadd %s169, %s174
          %s176 = smul.addr %s24, 2
          %s177 = sadd.s32 %s25, %s176
          %s178 = smul.addr %s177, 64
          %s179 = scalar_lea.hbm %s1, %s178
          %s181 = sshll.u32 %s172, 4
          %s182 = int_to_ptr.vmem [resolvable:$true] %s181
          %184 = dma.hbm_to_vmem [thread:$0]  %s179, 64, %s182, %s169
        $region24: #{tpu_custom_call.1} parent=15 // pred_fallthru
          _
      $region16: #{tpu_custom_call.1} parent=5 // pred_fallthru
        _
      %p185 = scmp.le.s32.totalorder 1, %s17
      %p186 = scmp.lt.s32.totalorder %s17, 5
      %p187 = pnand %p185, %p186
      %p188 = pneg %p187
      // Predicated region
      $region25: #{tpu_custom_call.1} parent=5 // pred_check
        _
      $region26: #{tpu_custom_call.1} parent=5 // pred_check_branch
        %190 = sbr.rel (%p187) target = $region28
      $region27: #{tpu_custom_call.1} parent=5 // pred_region
        %s191 = ssub.s32 %s17, 1
        %s192 = sand.u32 %s53, 1
        %s193 = scalar_lea.sflag [#allocation3], %s192
        %s194 = sand.u32 %s53, 1
        %s195 = smul.addr %s194, 4
        %s196 = scalar_lea.vmem [#allocation2], %s195
        // Predicated region
        $region29: #{tpu_custom_call.1} parent=27 // pred_check
          %p197 = pneg %p66
        $region30: #{tpu_custom_call.1} parent=27 // pred_check_branch
          %199 = sbr.rel (%p197) target = $region32
        $region31: #{tpu_custom_call.1} parent=27 // pred_region
          %200 = dma.done %s193, 64
        $region32: #{tpu_custom_call.1} parent=27 // pred_fallthru
          _
        %s201 = sand.u32 %s81, 1
        %s202 = scalar_lea.sflag [#allocation6], %s201
        %s203 = sand.u32 %s81, 1
        %s204 = smul.addr %s203, 4
        %s205 = scalar_lea.vmem [#allocation5], %s204
        // Predicated region
        $region33: #{tpu_custom_call.1} parent=27 // pred_check
          %p206 = pneg %p94
        $region34: #{tpu_custom_call.1} parent=27 // pred_check_branch
          %208 = sbr.rel (%p206) target = $region36
        $region35: #{tpu_custom_call.1} parent=27 // pred_region
          %209 = dma.done %s202, 64
        $region36: #{tpu_custom_call.1} parent=27 // pred_fallthru
          _
        %s210 = sand.u32 %s53, 1
        %s211 = scalar_lea.sflag [#allocation3], %s210
        %s212 = sand.u32 %s53, 1
        %s213 = smul.addr %s212, 4
        %s214 = scalar_lea.vmem [#allocation2], %s213
        %p215 = pneg %p66
        %p216 = pneg %p63
        %s217 = sand.u32 %s81, 1
        %s218 = scalar_lea.sflag [#allocation6], %s217
        %s219 = sand.u32 %s81, 1
        %s220 = smul.addr %s219, 4
        %s221 = scalar_lea.vmem [#allocation5], %s220
        %p222 = pneg %p94
        %p223 = pneg %p91
        %p224 = pneg %p124
        %p225 = pneg %p121
        %s226 = sand.u32 %s111, 1
        %s227 = scalar_lea.sflag [#allocation4], %s226
        %s228 = sand.u32 %s111, 1
        %s229 = smul.addr %s228, 4
        %s230 = scalar_lea.vmem [#allocation7], %s229
        %v231 = vld [vmem:[%s196] sm:$0xf]
        %v232 = vld [vmem:[%s205] sm:$0xf]
        %v233 = vadd.f32 %v231, %v232
        %234 = vst [vmem:[%s230] sm:$0xf] %v233
        %s235 = sand.u32 %s111, 1
        %s236 = scalar_lea.sflag [#allocation4], %s235
        %s237 = sand.u32 %s111, 1
        %s238 = smul.addr %s237, 4
        %s239 = scalar_lea.vmem [#allocation7], %s238
        // Predicated region
        $region37: #{tpu_custom_call.1} parent=27 // pred_check
          %p240 = pneg %p121
        $region38: #{tpu_custom_call.1} parent=27 // pred_check_branch
          %242 = sbr.rel (%p240) target = $region40
        $region39: #{tpu_custom_call.1} parent=27 // pred_region
          %s244 = ssub.s32 64, 64
          %245 = vsyncadd %s236, %s244
          %s246 = smul.addr %s27, 2
          %s247 = sadd.s32 %s28, %s246
          %s248 = smul.addr %s29, 2
          %s249 = sadd.s32 %s247, %s248
          %s250 = smul.addr %s249, 64
          %s251 = scalar_lea.hbm %s2, %s250
          %s253 = sshll.u32 %s239, 4
          %s254 = int_to_ptr.vmem [resolvable:$true] %s253
          %256 = dma.vmem_to_hbm [thread:$0]  %s254, 64, %s251, %s236
        $region40: #{tpu_custom_call.1} parent=27 // pred_fallthru
          _
      $region28: #{tpu_custom_call.1} parent=5 // pred_fallthru
        _
      %p257 = scmp.le.s32.totalorder 2, %s17
      // Predicated region
      $region41: #{tpu_custom_call.1} parent=5 // pred_check
        %p258 = pneg %p257
      $region42: #{tpu_custom_call.1} parent=5 // pred_check_branch
        %260 = sbr.rel (%p258) target = $region44
      $region43: #{tpu_custom_call.1} parent=5 // pred_region
        %s261 = ssub.s32 %s17, 2
        // Predicated region
        $region45: #{tpu_custom_call.1} parent=43 // pred_check
          %p262 = pneg %p127
        $region46: #{tpu_custom_call.1} parent=43 // pred_check_branch
          %264 = sbr.rel (%p262) target = $region48
        $region47: #{tpu_custom_call.1} parent=43 // pred_region
          %s265 = sand.u32 %s112, 1
          %s266 = scalar_lea.sflag [#allocation4], %s265
          %s267 = sand.u32 %s112, 1
          %s268 = smul.addr %s267, 4
          %s269 = scalar_lea.vmem [#allocation7], %s268
          %270 = dma.done %s266, 64
        $region48: #{tpu_custom_call.1} parent=43 // pred_fallthru
          _
      $region44: #{tpu_custom_call.1} parent=5 // pred_fallthru
        _
    $region6: #{tpu_custom_call.1} parent=1 // loop_footer
      %s21 = sadd.s32 1, %s17
    $region7: #{tpu_custom_call.1} parent=1 // loop_footer_branch
      %16 = sbr.rel target = $region3
    $region8: #{tpu_custom_call.1} parent=1 // loop_exit
      _
    %271 = vsyncpa [#allocation3], 1
    %s272 = scalar_lea.sflag [#allocation3], 1
    %273 = vsyncpa %s272, 1
    %274 = vsyncpa [#allocation6], 1
    %s275 = scalar_lea.sflag [#allocation6], 1
    %276 = vsyncpa %s275, 1
    %277 = vsyncpa [#allocation4], 1
    %s278 = scalar_lea.sflag [#allocation4], 1
    %279 = vsyncpa %s278, 1

</llo_original>
